<compile_context>
chip_gen: v6e
topology: v6e:2x2x1
jax: 0.10.0
libtpu: 0.0.40
codegen_flags: <defaults>
</compile_context>

<pallas_src>
import jax
import jax.numpy as jnp
from jax.experimental import pallas as pl
from jax.experimental.pallas import tpu as pltpu


def _pad_affine_transpose_kernel(x_ref, w_ref, b_ref, o_ref):
    """Fused pad(1) + 1x1-conv affine + (+other) + transpose(2,1).

    x_ref: (N, H, W)          VMEM, input pixels (C_in == 1 folded away)
    w_ref: (Cout,)            SMEM, per-output-channel 1x1 conv weights
    b_ref: (Cout,)            SMEM, bias + other (pre-folded in the wrapper)
    o_ref: (N, Hp, Cout*Wp)   VMEM, == (conv(x)+other).transpose(2,1) flattened
                              over its last two (contiguous) dims.
    """
    n, h, w = x_ref.shape
    _, hp, cwp = o_ref.shape
    cout = w_ref.shape[0]
    wp = w + 2  # padded width of one channel slab

    x = x_ref[...]  # (N, H, W) f32

    # ---- Store 1: full-tile, lane-dense fill with the per-channel border value.
    # Border of the padded 1x1 conv is exactly bias + other; lane k belongs to
    # channel k // Wp, selected with a lane-iota mask (no VMEM broadcasts).
    lane = jax.lax.broadcasted_iota(jnp.int32, o_ref.shape, 2)
    fill = b_ref[0] + jnp.zeros(o_ref.shape, jnp.float32)      # splat of scalar
    for c in range(1, cout):
        fill = jnp.where(lane >= c * wp, b_ref[c], fill)
    o_ref[...] = fill

    # ---- Stores 2..1+Cout: overwrite each channel slab's interior with
    # w[c] * x + (bias[c] + other).  Scalars come from SMEM; value is built
    # fully in registers and written once per channel.
    for c in range(cout):
        o_ref[:, 1:h + 1, c * wp + 1:c * wp + 1 + w] = x * w_ref[c] + b_ref[c]


@jax.jit
def model_forward(x, weight, bias, other=1.0):
    """Forward pass of the PyTorch Model (padding1=None branch).

    Args:
      x:      (N, 1, H, W)   float32, NCHW.
      weight: (Cout, 1, 1, 1) float32 (1x1 conv weights).
      bias:   (Cout,) float32.
      other:  scalar added after the conv (PyTorch default other=1).

    Returns:
      (N, H+2, Cout, W+2) float32 == (conv(x) + other).transpose(2, 1)
    """
    N, Cin, H, W = x.shape
    assert Cin == 1
    Cout = weight.shape[0]
    Hp, Wp = H + 2, W + 2

    # Free layout glue (row-major byte-identical reshapes); the +other fold is a
    # 3-element add, all inside this jit so there are no extra dispatches.
    x_r = x.astype(jnp.float32).reshape(N, H, W)
    w_r = weight.astype(jnp.float32).reshape(Cout)
    b_r = (bias + other).astype(jnp.float32)

    out = pl.pallas_call(
        _pad_affine_transpose_kernel,
        out_shape=jax.ShapeDtypeStruct((N, Hp, Cout * Wp), jnp.float32),
        # Single invocation (no grid): whole arrays live in VMEM/SMEM; total
        # data is a few KB, so one step avoids all per-grid-step overhead.
        in_specs=[
            pl.BlockSpec(memory_space=pltpu.MemorySpace.VMEM),   # x  (lane-dense)
            pl.BlockSpec(memory_space=pltpu.MemorySpace.SMEM),   # weight scalars
            pl.BlockSpec(memory_space=pltpu.MemorySpace.SMEM),   # bias+other scalars
        ],
        out_specs=pl.BlockSpec(memory_space=pltpu.MemorySpace.VMEM),
    )(x_r, w_r, b_r)

    # (N, Hp, Cout*Wp) -> (N, Hp, Cout, Wp): same bytes in row-major, free.
    return out.reshape(N, Hp, Cout, Wp)


if __name__ == "__main__":
    key = jax.random.PRNGKey(0)
    kx, kw, kb = jax.random.split(key, 3)

    # Small shapes consistent with the module: N=1, C_in=1, spatial=16, C_out=3.
    x = jax.random.normal(kx, (1, 1, 16, 16), dtype=jnp.float32)
    weight = jax.random.normal(kw, (3, 1, 1, 1), dtype=jnp.float32) * 0.5
    bias = jax.random.normal(kb, (3,), dtype=jnp.float32) * 0.1

    out = jax.block_until_ready(model_forward(x, weight, bias, 1.0))

    # Pure-JAX reference for correctness.
    x_pad = jnp.pad(x, ((0, 0), (0, 0), (1, 1), (1, 1)))
    ref = x_pad * weight.reshape(1, 3, 1, 1) + bias.reshape(1, 3, 1, 1) + 1.0
    ref = jnp.transpose(ref, (0, 2, 1, 3))

    assert out.shape == (1, 18, 3, 18), out.shape
    assert jnp.allclose(out, ref, atol=1e-5, rtol=1e-5), float(
        jnp.abs(out - ref).max()
    )
    print("KERNEL_OK")
</pallas_src>

<mosaic_0001>
module attributes {stable_mosaic.version = 11 : i64} {
  func.func @_pad_affine_transpose_kernel(%arg0: memref<1x16x16xf32, #tpu.memory_space<vmem>>, %arg1: memref<3xf32, #tpu.memory_space<smem>>, %arg2: memref<3xf32, #tpu.memory_space<smem>>, %arg3: memref<1x18x54xf32, #tpu.memory_space<vmem>>) attributes {dimension_semantics = [], scalar_prefetch = 0 : i64, scratch_operands = 0 : i64, tpu.core_type = #tpu.core_type<tc>} {
    %c0 = arith.constant 0 : index
    %c0_0 = arith.constant 0 : index
    %c0_1 = arith.constant 0 : index
    %0 = vector.load %arg0[%c0, %c0_0, %c0_1] : memref<1x16x16xf32, #tpu.memory_space<vmem>>, vector<1x16x16xf32>
    %1 = tpu.iota {dimensions = array<i32: 2>} : vector<1x18x54xi32>
    %c0_2 = arith.constant 0 : index
    %2 = memref.load %arg2[%c0_2] : memref<3xf32, #tpu.memory_space<smem>>
    %cst = arith.constant 0.000000e+00 : f32
    %3 = vector.broadcast %cst : f32 to vector<1x18x54xf32>
    %4 = vector.broadcast %2 : f32 to vector<1x18x54xf32>
    %5 = arith.addf %4, %3 : vector<1x18x54xf32>
    %c18_i32 = arith.constant 18 : i32
    %6 = vector.broadcast %c18_i32 : i32 to vector<1x18x54xi32>
    %7 = arith.cmpi sge, %1, %6 : vector<1x18x54xi32>
    %c1 = arith.constant 1 : index
    %8 = memref.load %arg2[%c1] : memref<3xf32, #tpu.memory_space<smem>>
    %9 = vector.broadcast %8 : f32 to vector<1x18x54xf32>
    %10 = arith.select %7, %9, %5 : vector<1x18x54xi1>, vector<1x18x54xf32>
    %c36_i32 = arith.constant 36 : i32
    %11 = vector.broadcast %c36_i32 : i32 to vector<1x18x54xi32>
    %12 = arith.cmpi sge, %1, %11 : vector<1x18x54xi32>
    %c2 = arith.constant 2 : index
    %13 = memref.load %arg2[%c2] : memref<3xf32, #tpu.memory_space<smem>>
    %14 = vector.broadcast %13 : f32 to vector<1x18x54xf32>
    %15 = arith.select %12, %14, %10 : vector<1x18x54xi1>, vector<1x18x54xf32>
    %c0_3 = arith.constant 0 : index
    %c0_4 = arith.constant 0 : index
    %c0_5 = arith.constant 0 : index
    %16 = vector.load %arg3[%c0_3, %c0_4, %c0_5] : memref<1x18x54xf32, #tpu.memory_space<vmem>>, vector<1x18x54xf32>
    tpu.vector_store %arg3[%c0_3, %c0_4, %c0_5], %15 {strides = array<i32>} : memref<1x18x54xf32, #tpu.memory_space<vmem>>, vector<1x18x54xf32>,
    %c0_6 = arith.constant 0 : index
    %17 = memref.load %arg1[%c0_6] : memref<3xf32, #tpu.memory_space<smem>>
    %18 = vector.broadcast %17 : f32 to vector<1x16x16xf32>
    %19 = arith.mulf %0, %18 : vector<1x16x16xf32>
    %c0_7 = arith.constant 0 : index
    %20 = memref.load %arg2[%c0_7] : memref<3xf32, #tpu.memory_space<smem>>
    %21 = vector.broadcast %20 : f32 to vector<1x16x16xf32>
    %22 = arith.addf %19, %21 : vector<1x16x16xf32>
    %c0_8 = arith.constant 0 : index
    %c1_9 = arith.constant 1 : index
    %c1_10 = arith.constant 1 : index
    %23 = vector.load %arg3[%c0_8, %c1_9, %c1_10] : memref<1x18x54xf32, #tpu.memory_space<vmem>>, vector<1x16x16xf32>
    tpu.vector_store %arg3[%c0_8, %c1_9, %c1_10], %22 {strides = array<i32>} : memref<1x18x54xf32, #tpu.memory_space<vmem>>, vector<1x16x16xf32>,
    %c1_11 = arith.constant 1 : index
    %24 = memref.load %arg1[%c1_11] : memref<3xf32, #tpu.memory_space<smem>>
    %25 = vector.broadcast %24 : f32 to vector<1x16x16xf32>
    %26 = arith.mulf %0, %25 : vector<1x16x16xf32>
    %c1_12 = arith.constant 1 : index
    %27 = memref.load %arg2[%c1_12] : memref<3xf32, #tpu.memory_space<smem>>
    %28 = vector.broadcast %27 : f32 to vector<1x16x16xf32>
    %29 = arith.addf %26, %28 : vector<1x16x16xf32>
    %c0_13 = arith.constant 0 : index
    %c1_14 = arith.constant 1 : index
    %c19 = arith.constant 19 : index
    %30 = vector.load %arg3[%c0_13, %c1_14, %c19] : memref<1x18x54xf32, #tpu.memory_space<vmem>>, vector<1x16x16xf32>
    tpu.vector_store %arg3[%c0_13, %c1_14, %c19], %29 {strides = array<i32>} : memref<1x18x54xf32, #tpu.memory_space<vmem>>, vector<1x16x16xf32>,
    %c2_15 = arith.constant 2 : index
    %31 = memref.load %arg1[%c2_15] : memref<3xf32, #tpu.memory_space<smem>>
    %32 = vector.broadcast %31 : f32 to vector<1x16x16xf32>
    %33 = arith.mulf %0, %32 : vector<1x16x16xf32>
    %c2_16 = arith.constant 2 : index
    %34 = memref.load %arg2[%c2_16] : memref<3xf32, #tpu.memory_space<smem>>
    %35 = vector.broadcast %34 : f32 to vector<1x16x16xf32>
    %36 = arith.addf %33, %35 : vector<1x16x16xf32>
    %c0_17 = arith.constant 0 : index
    %c1_18 = arith.constant 1 : index
    %c37 = arith.constant 37 : index
    %37 = vector.load %arg3[%c0_17, %c1_18, %c37] : memref<1x18x54xf32, #tpu.memory_space<vmem>>, vector<1x16x16xf32>
    tpu.vector_store %arg3[%c0_17, %c1_18, %c37], %36 {strides = array<i32>} : memref<1x18x54xf32, #tpu.memory_space<vmem>>, vector<1x16x16xf32>,
    return
  }
}

</mosaic_0001>

<llo_original>
// kernel: model_forward.1
$region0: #{model_forward.1}
  #allocation0 [shape = 'u32[]', space=smem, size = 0x4, offset = 0x4, fixed_abs, tag = 'smem constant byte address 0x4 - core index']
  #allocation1 [shape = 'u32[144,128]{1,0:T(1,128)}', space=vmem, size = 0x12000, scoped, tag = 'internal scratch']
  %s0 = inlined_call_operand.hbm [shape: f32[1,16,16], index: 0, kind: input, shape index: {}]
  %s1 = inlined_call_operand.vmem [shape: f32[3], index: 1, kind: input, shape index: {}]
  %s2 = inlined_call_operand.vmem [shape: f32[3], index: 2, kind: input, shape index: {}]
  %s3 = inlined_call_operand.vmem [shape: f32[1,18,54], index: 3, kind: output, shape index: {}]
  %s4 = sld [smem:[#allocation0]]
  $region34: #{model_forward.1} parent=0
    _
  %s6 = ssub.s32 1, %s4
  %s7 = scalar_select 0, %s6, %s4
  $region1: #{model_forward.1} parent=0
    #allocation2 [shape = 'u8[8192]{0}', space=vmem, size = 0x2000, scoped, tag = 'input window, operand 0, single buffered']
    #allocation3 [shape = 's32[1]{0}', space=sflag, size = 0x4, scoped, tag = 'scoped memory for model_forward.1']
    #allocation4 [shape = 's32[1]{0}', space=sflag, size = 0x4, scoped, tag = 'scoped memory for model_forward.1']
    #allocation5 [shape = 'u8[512]{0}', space=smem, size = 0x200, scoped, tag = 'input window, operand 1, single buffered']
    #allocation6 [shape = 'u8[512]{0}', space=smem, size = 0x200, scoped, tag = 'input window, operand 2, single buffered']
    #allocation7 [shape = 's32[1]{0}', space=sflag, size = 0x4, scoped, tag = 'scoped memory for model_forward.1']
    %8 = vsyncpa [#allocation3], 0
    %9 = vsyncpa [#allocation4], 0
    %10 = vsyncpa [#allocation7], 0
    // Predicated region
    $region2: #{model_forward.1} parent=1 // pred_check
      _
    $region3: #{model_forward.1} parent=1 // pred_check_branch
      %12 = sbr.rel (0) target = $region5
    $region4: #{model_forward.1} parent=1 // pred_region
      %s14 = ssub.s32 256, 256
      %15 = vsyncadd [#allocation3], %s14
      %s16 = sshll.u32 [#allocation2], 4
      %s17 = int_to_ptr.vmem [resolvable:$true] %s16
      %22 = dma.hbm_to_vmem [thread:$0]  %s0, 256, %s17, [#allocation3], 128, 128, 8
    $region5: #{model_forward.1} parent=1 // pred_fallthru
      _
    // Predicated region
    $region6: #{model_forward.1} parent=1 // pred_check
      _
    $region7: #{model_forward.1} parent=1 // pred_check_branch
      %24 = sbr.rel (0) target = $region9
    $region8: #{model_forward.1} parent=1 // pred_region
      %s26 = ssub.s32 16, 16
      %27 = vsyncadd [#allocation4], %s26
      %s29 = sshll.u32 %s1, 4
      %s30 = int_to_ptr.vmem [resolvable:$true] %s29
      %32 = dma.vmem_to_smem %s30, 16, [#allocation5], [#allocation4]
    $region9: #{model_forward.1} parent=1 // pred_fallthru
      _
    // Predicated region
    $region10: #{model_forward.1} parent=1 // pred_check
      _
    $region11: #{model_forward.1} parent=1 // pred_check_branch
      %34 = sbr.rel (0) target = $region13
    $region12: #{model_forward.1} parent=1 // pred_region
      %s36 = ssub.s32 16, 16
      %37 = vsyncadd [#allocation7], %s36
      %s39 = sshll.u32 %s2, 4
      %s40 = int_to_ptr.vmem [resolvable:$true] %s39
      %42 = dma.vmem_to_smem %s40, 16, [#allocation6], [#allocation7]
    $region13: #{model_forward.1} parent=1 // pred_fallthru
      _
    // Predicated region
    $region14: #{model_forward.1} parent=1 // pred_check
      _
    $region15: #{model_forward.1} parent=1 // pred_check_branch
      %44 = sbr.rel (0) target = $region17
    $region16: #{model_forward.1} parent=1 // pred_region
      %45 = dma.done [#allocation3], 256
    $region17: #{model_forward.1} parent=1 // pred_fallthru
      _
    // Predicated region
    $region18: #{model_forward.1} parent=1 // pred_check
      _
    $region19: #{model_forward.1} parent=1 // pred_check_branch
      %47 = sbr.rel (0) target = $region21
    $region20: #{model_forward.1} parent=1 // pred_region
      %48 = dma.done [#allocation4], 16
    $region21: #{model_forward.1} parent=1 // pred_fallthru
      _
    // Predicated region
    $region22: #{model_forward.1} parent=1 // pred_check
      _
    $region23: #{model_forward.1} parent=1 // pred_check_branch
      %50 = sbr.rel (0) target = $region25
    $region24: #{model_forward.1} parent=1 // pred_region
      %51 = dma.done [#allocation7], 16
    $region25: #{model_forward.1} parent=1 // pred_fallthru
      _
    %52 = sfence
    %v53 = vld [vmem:[#allocation2] sm:$0xff]
    %v54 = vld [vmem:[#allocation2 + $0x8] sm:$0xff]
    %v55 = vlaneseq
    %v56 = vand.u32 %v55, 127
    %s57 = sld [smem:[#allocation6]]
    %v58 = vstv %s57
    %v59 = vadd.f32 %v58, 0.0
    %vm60 = vcmp.ge.s32.totalorder %v56, 18
    %s61 = sld [smem:[#allocation6 + $0x1]]
    %v62 = vstv %s61
    %v63 = vsel %vm60, %v62, %v59
    %vm64 = vcmp.ge.s32.totalorder %v56, 36
    %s65 = sld [smem:[#allocation6 + $0x2]]
    %v66 = vstv %s65
    %v67 = vsel %vm64, %v66, %v63
    %vm68 = vcmask 441344
    %69 = vst.msk [vmem:[%s3] sm:$0xff] %vm68, %v67
    %70 = vst.msk [vmem:[%s3 + $0x8] sm:$0xff] %vm68, %v67
    %vm71 = vcmask 435200
    %72 = vst.msk [vmem:[%s3 + $0x10] sm:$0x3] %vm71, %v67
    %s73 = sld [smem:[#allocation5]]
    %v74 = vstv %s73
    %v75 = vmul.f32 %v53, %v74
    %v76 = vmul.f32 %v54, %v74
    %s77 = sld [smem:[#allocation6]]
    %v78 = vstv %s77
    %v79 = vadd.f32 %v75, %v78
    %v80 = vadd.f32 %v76, %v78
    %83 = vrot.lane.b32.xlu0 %v79, 1
    %v84 = vpop.permute.xlu0 %83
    %85 = vrot.lane.b32.xlu0 %v80, 1
    %v86 = vpop.permute.xlu0 %85
    %vm89 = vcmask 138248
    %90 = vst.msk [vmem:[%s3 + $0x1] sm:$0xff] %vm89, %v84
    %91 = vst.msk [vmem:[%s3 + $0x9] sm:$0xff] %vm89, %v86
    %s92 = sld [smem:[#allocation5 + $0x1]]
    %v93 = vstv %s92
    %v94 = vmul.f32 %v53, %v93
    %v95 = vmul.f32 %v54, %v93
    %s96 = sld [smem:[#allocation6 + $0x1]]
    %v97 = vstv %s96
    %v98 = vadd.f32 %v94, %v97
    %v99 = vadd.f32 %v95, %v97
    %102 = vrot.lane.b32.xlu0 %v98, 19
    %v103 = vpop.permute.xlu0 %102
    %104 = vrot.lane.b32.xlu0 %v99, 19
    %v105 = vpop.permute.xlu0 %104
    %vm108 = vcmask 285848
    %109 = vst.msk [vmem:[%s3 + $0x1] sm:$0xff] %vm108, %v103
    %110 = vst.msk [vmem:[%s3 + $0x9] sm:$0xff] %vm108, %v105
    %s111 = sld [smem:[#allocation5 + $0x2]]
    %v112 = vstv %s111
    %v113 = vmul.f32 %v53, %v112
    %v114 = vmul.f32 %v54, %v112
    %s115 = sld [smem:[#allocation6 + $0x2]]
    %v116 = vstv %s115
    %v117 = vadd.f32 %v113, %v116
    %v118 = vadd.f32 %v114, %v116
    %121 = vrot.lane.b32.xlu0 %v117, 37
    %v122 = vpop.permute.xlu0 %121
    %123 = vrot.lane.b32.xlu0 %v118, 37
    %v124 = vpop.permute.xlu0 %123
    %vm127 = vcmask 433448
    %128 = vst.msk [vmem:[%s3 + $0x1] sm:$0xff] %vm127, %v122
    %129 = vst.msk [vmem:[%s3 + $0x9] sm:$0xff] %vm127, %v124
    // Predicated region
    $region26: #{model_forward.1} parent=1 // pred_check
      _
    $region27: #{model_forward.1} parent=1 // pred_check_branch
      %131 = sbr.rel (0) target = $region29
    $region28: #{model_forward.1} parent=1 // pred_region
      _
    $region29: #{model_forward.1} parent=1 // pred_fallthru
      _
    // Predicated region
    $region30: #{model_forward.1} parent=1 // pred_check
      _
    $region31: #{model_forward.1} parent=1 // pred_check_branch
      %133 = sbr.rel (0) target = $region33
    $region32: #{model_forward.1} parent=1 // pred_region
      _
    $region33: #{model_forward.1} parent=1 // pred_fallthru
      _
    %134 = vsyncpa [#allocation3], 1
    %135 = vsyncpa [#allocation4], 1
    %136 = vsyncpa [#allocation7], 1

</llo_original>
